<compile_context>
chip_gen: v5e
topology: v5e:2x2
jax: 0.10.0
libtpu: 0.0.40
codegen_flags: <defaults>
</compile_context>

<pallas_src>
import jax
import jax.numpy as jnp
from jax.experimental import pallas as pl
from jax.experimental.pallas import tpu as pltpu


def product_layer_kernel(x_ref, w_ref, o_ref):
    # Elementwise plog on VPU/EUP, matmul on MXU, exp on EUP.
    x = x_ref[...]
    if x.dtype != jnp.float32:          # keep elementwise math in f32
        x = x.astype(jnp.float32)
    logx = jnp.log(jnp.maximum(jnp.abs(x), 1e-5))

    w = w_ref[...]
    if w.dtype != jnp.float32:
        w = w.astype(jnp.float32)

    inter = jnp.dot(logx, w, preferred_element_type=jnp.float32)
    o_ref[...] = jnp.exp(inter).astype(o_ref.dtype)


def _round_up(n, m):
    return ((n + m - 1) // m) * m


def product_layer(x, w, *, tm=512):
    """x: (B, d_in), w: (d_in, d_out) (i.e. PyTorch Linear weight transposed)."""
    B, d_in = x.shape
    d_out = w.shape[1]

    # --- Lane-dense output: pad d_out to a multiple of 128 (zeros -> exp(0)=1,
    #     sliced off below).  Extra HBM traffic is negligible at these sizes.
    d_out_p = _round_up(d_out, 128)
    if d_out_p != d_out:
        w = jnp.pad(w, ((0, 0), (0, d_out_p - d_out)))

    # --- Row tile: as large as possible (multiple of 8), clamped to the batch.
    tm = max(8, min(tm, _round_up(B, 8)))
    B_p = _round_up(B, tm)
    if B_p != B:
        # Pad rows with 1.0: log(clamp(|1|,1e-5)) = 0, harmless; rows sliced off.
        x = jnp.pad(x, ((0, B_p - B), (0, 0)), constant_values=1.0)

    grid = (B_p // tm,)

    # VMEM budget: double-buffered x/out tiles + resident (single-block) weight.
    itemsize = 4
    vmem_bytes = 2 * (tm * d_in + tm * d_out_p) * itemsize + 2 * (d_in * d_out_p) * itemsize
    vmem_limit = min(max(2 * vmem_bytes, 4 << 20), 64 << 20)

    cost = pl.CostEstimate(
        flops=2 * B_p * d_in * d_out_p,
        transcendentals=B_p * (d_in + d_out_p),
        bytes_accessed=(B_p * d_in + d_in * d_out_p + B_p * d_out_p) * itemsize,
    )

    out = pl.pallas_call(
        product_layer_kernel,
        out_shape=jax.ShapeDtypeStruct((B_p, d_out_p), x.dtype),
        grid_spec=pltpu.PrefetchScalarGridSpec(
            num_scalar_prefetch=0,
            grid=grid,
            in_specs=[
                pl.BlockSpec((tm, d_in), lambda i: (i, 0)),        # row tile of x
                pl.BlockSpec((d_in, d_out_p), lambda i: (0, 0)),   # full weight, resident
            ],
            out_specs=pl.BlockSpec((tm, d_out_p), lambda i: (i, 0)),
        ),
        compiler_params=pltpu.CompilerParams(
            dimension_semantics=("parallel",),
            vmem_limit_bytes=vmem_limit,
        ),
        cost_estimate=cost,
    )(x, w)

    # Slice off batch/output padding.
    return out[:B, :d_out]


if __name__ == "__main__":
    # Small shapes consistent with the module's forward: (batch, d_in) -> (batch, d_out)
    B, d_in, d_out = 128, 32, 16

    key = jax.random.PRNGKey(0)
    kx, kw = jax.random.split(key)
    x = jax.random.normal(kx, (B, d_in), dtype=jnp.float32)

    # Deterministic Linear weight (PyTorch layout (d_out, d_in)); store transposed.
    # scalar_mult=False (module default) -> no bias term.
    w_torch_layout = jax.random.uniform(
        kw, (d_out, d_in), dtype=jnp.float32,
        minval=-1.0 / jnp.sqrt(d_in), maxval=1.0 / jnp.sqrt(d_in))
    w = w_torch_layout.T  # (d_in, d_out)

    out = product_layer(x, w)
    out = jax.block_until_ready(out)

    # Reference check in plain JAX.
    ref = jnp.exp(jnp.log(jnp.maximum(jnp.abs(x), 1e-5)) @ w)
    assert out.shape == (B, d_out)
    assert jnp.allclose(out, ref, rtol=1e-4, atol=1e-4), "mismatch vs reference"

    print("KERNEL_OK")
</pallas_src>

<mosaic_0001>
module attributes {stable_mosaic.version = 11 : i64} {
  func.func @product_layer_kernel(%arg0: i32, %arg1: memref<128x32xf32, #tpu.memory_space<vmem>>, %arg2: memref<32x128xf32, #tpu.memory_space<vmem>>, %arg3: memref<128x128xf32, #tpu.memory_space<vmem>>) attributes {dimension_semantics = [#tpu.dimension_semantics<parallel>], iteration_bounds = array<i64: 1>, scalar_prefetch = 0 : i64, scratch_operands = 0 : i64, tpu.core_type = #tpu.core_type<tc>, window_params = [{transform_indices = @transform_0, window_bounds = array<i64: 128, 32>}, {pipeline_mode = #tpu.pipeline_mode<synchronous>, transform_indices = @transform_1, window_bounds = array<i64: 32, 128>}, {transform_indices = @transform_2, window_bounds = array<i64: 128, 128>}]} {
    %c0 = arith.constant 0 : index
    %c0_0 = arith.constant 0 : index
    %0 = vector.load %arg1[%c0, %c0_0] : memref<128x32xf32, #tpu.memory_space<vmem>>, vector<128x32xf32>
    %1 = math.absf %0 : vector<128x32xf32>
    %cst = arith.constant 9.99999974E-6 : f32
    %2 = vector.broadcast %cst : f32 to vector<128x32xf32>
    %3 = arith.maximumf %1, %2 : vector<128x32xf32>
    %4 = math.log %3 : vector<128x32xf32>
    %c0_1 = arith.constant 0 : index
    %c0_2 = arith.constant 0 : index
    %5 = vector.load %arg2[%c0_1, %c0_2] : memref<32x128xf32, #tpu.memory_space<vmem>>, vector<32x128xf32>
    %cst_3 = arith.constant dense<0.000000e+00> : vector<128x128xf32>
    %6 = tpu.matmul %4, %5, %cst_3 {dimension_numbers = #tpu.dot_dimension_numbers<[1], [0], [0], [1], [0, 0, 1, 1], [], []>} : vector<128x32xf32>, vector<32x128xf32>, vector<128x128xf32> -> vector<128x128xf32>
    %7 = math.exp %6 : vector<128x128xf32>
    %c0_4 = arith.constant 0 : index
    %c0_5 = arith.constant 0 : index
    %8 = vector.load %arg3[%c0_4, %c0_5] : memref<128x128xf32, #tpu.memory_space<vmem>>, vector<128x128xf32>
    tpu.vector_store %arg3[%c0_4, %c0_5], %7 {strides = array<i32>} : memref<128x128xf32, #tpu.memory_space<vmem>>, vector<128x128xf32>,
    return
  }
  func.func @transform_0(%arg0: i32) -> (i32, i32) {
    %c0_i32 = arith.constant 0 : i32
    %c0_i32_0 = arith.constant 0 : i32
    return %arg0, %c0_i32 : i32, i32
  }
  func.func @transform_1(%arg0: i32) -> (i32, i32) {
    %c0_i32 = arith.constant 0 : i32
    %c0_i32_0 = arith.constant 0 : i32
    %c0_i32_1 = arith.constant 0 : i32
    return %c0_i32, %c0_i32_0 : i32, i32
  }
  func.func @transform_2(%arg0: i32) -> (i32, i32) {
    %c0_i32 = arith.constant 0 : i32
    %c0_i32_0 = arith.constant 0 : i32
    return %arg0, %c0_i32 : i32, i32
  }
}

</mosaic_0001>

<llo_original>
// kernel: tpu_custom_call.1
$region0: #{tpu_custom_call.1}
  #allocation0 [shape = 'u32[]', space=smem, size = 0x4, offset = 0x4, fixed_abs, tag = 'smem constant byte address 0x4 - core index']
  #allocation1 [shape = 'u32[72,128]{1,0:T(1,128)}', space=vmem, size = 0x9000, scoped, tag = 'internal scratch']
  %s0 = inlined_call_operand.vmem [shape: f32[128,32], index: 0, kind: input, shape index: {}]
  %s1 = inlined_call_operand.vmem [shape: f32[32,128], index: 1, kind: input, shape index: {}]
  %s2 = inlined_call_operand.hbm [shape: f32[128,128], index: 2, kind: output, shape index: {}]
  %s3 = sld [smem:[#allocation0]]
  $region18: #{tpu_custom_call.1} parent=0
    _
  %s5 = ssub.s32 1, %s3
  %s6 = scalar_select 0, %s5, %s3
  $region1: #{tpu_custom_call.1} parent=0
    #allocation2 [shape = 'u8[65536]{0}', space=vmem, size = 0x10000, scoped, tag = 'output window, operand 0, single buffered']
    #allocation3 [shape = 's32[1]{0}', space=sflag, size = 0x4, scoped, tag = 'scoped memory for tpu_custom_call.1']
    %7 = vsyncpa [#allocation3], 0
    // Predicated region
    $region2: #{tpu_custom_call.1} parent=1 // pred_check
      _
    $region3: #{tpu_custom_call.1} parent=1 // pred_check_branch
      %9 = sbr.rel (0) target = $region5
    $region4: #{tpu_custom_call.1} parent=1 // pred_region
      _
    $region5: #{tpu_custom_call.1} parent=1 // pred_fallthru
      _
    // Predicated region
    $region6: #{tpu_custom_call.1} parent=1 // pred_check
      _
    $region7: #{tpu_custom_call.1} parent=1 // pred_check_branch
      %11 = sbr.rel (0) target = $region9
    $region8: #{tpu_custom_call.1} parent=1 // pred_region
      _
    $region9: #{tpu_custom_call.1} parent=1 // pred_fallthru
      _
    %v12 = vld [vmem:[%s0] sm:$0xff]
    %v13 = vld [vmem:[%s0 + $0x8] sm:$0xff]
    %v14 = vld [vmem:[%s0 + $0x10] sm:$0xff]
    %v15 = vld [vmem:[%s0 + $0x18] sm:$0xff]
    %v16 = vld [vmem:[%s0 + $0x20] sm:$0xff]
    %v17 = vld [vmem:[%s0 + $0x28] sm:$0xff]
    %v18 = vld [vmem:[%s0 + $0x30] sm:$0xff]
    %v19 = vld [vmem:[%s0 + $0x38] sm:$0xff]
    %v20 = vld [vmem:[%s0 + $0x40] sm:$0xff]
    %v21 = vld [vmem:[%s0 + $0x48] sm:$0xff]
    %v22 = vld [vmem:[%s0 + $0x50] sm:$0xff]
    %v23 = vld [vmem:[%s0 + $0x58] sm:$0xff]
    %v24 = vld [vmem:[%s0 + $0x60] sm:$0xff]
    %v25 = vld [vmem:[%s0 + $0x68] sm:$0xff]
    %v26 = vld [vmem:[%s0 + $0x70] sm:$0xff]
    %v27 = vld [vmem:[%s0 + $0x78] sm:$0xff]
    %v28 = vand.u32 2147483647, %v12
    %v29 = vand.u32 2147483647, %v13
    %v30 = vand.u32 2147483647, %v14
    %v31 = vand.u32 2147483647, %v15
    %v32 = vand.u32 2147483647, %v16
    %v33 = vand.u32 2147483647, %v17
    %v34 = vand.u32 2147483647, %v18
    %v35 = vand.u32 2147483647, %v19
    %v36 = vand.u32 2147483647, %v20
    %v37 = vand.u32 2147483647, %v21
    %v38 = vand.u32 2147483647, %v22
    %v39 = vand.u32 2147483647, %v23
    %v40 = vand.u32 2147483647, %v24
    %v41 = vand.u32 2147483647, %v25
    %v42 = vand.u32 2147483647, %v26
    %v43 = vand.u32 2147483647, %v27
    %v44 = vmax.f32 %v28, 1e-05
    %v45 = vmax.f32 %v29, 1e-05
    %v46 = vmax.f32 %v30, 1e-05
    %v47 = vmax.f32 %v31, 1e-05
    %v48 = vmax.f32 %v32, 1e-05
    %v49 = vmax.f32 %v33, 1e-05
    %v50 = vmax.f32 %v34, 1e-05
    %v51 = vmax.f32 %v35, 1e-05
    %v52 = vmax.f32 %v36, 1e-05
    %v53 = vmax.f32 %v37, 1e-05
    %v54 = vmax.f32 %v38, 1e-05
    %v55 = vmax.f32 %v39, 1e-05
    %v56 = vmax.f32 %v40, 1e-05
    %v57 = vmax.f32 %v41, 1e-05
    %v58 = vmax.f32 %v42, 1e-05
    %v59 = vmax.f32 %v43, 1e-05
    %v60 = vlog2.pop %v44
    %v61 = vmul.f32 %v60, 0.6931472
    %v62 = vlog2.pop %v45
    %v63 = vmul.f32 %v62, 0.6931472
    %v64 = vlog2.pop %v46
    %v65 = vmul.f32 %v64, 0.6931472
    %v66 = vlog2.pop %v47
    %v67 = vmul.f32 %v66, 0.6931472
    %v68 = vlog2.pop %v48
    %v69 = vmul.f32 %v68, 0.6931472
    %v70 = vlog2.pop %v49
    %v71 = vmul.f32 %v70, 0.6931472
    %v72 = vlog2.pop %v50
    %v73 = vmul.f32 %v72, 0.6931472
    %v74 = vlog2.pop %v51
    %v75 = vmul.f32 %v74, 0.6931472
    %v76 = vlog2.pop %v52
    %v77 = vmul.f32 %v76, 0.6931472
    %v78 = vlog2.pop %v53
    %v79 = vmul.f32 %v78, 0.6931472
    %v80 = vlog2.pop %v54
    %v81 = vmul.f32 %v80, 0.6931472
    %v82 = vlog2.pop %v55
    %v83 = vmul.f32 %v82, 0.6931472
    %v84 = vlog2.pop %v56
    %v85 = vmul.f32 %v84, 0.6931472
    %v86 = vlog2.pop %v57
    %v87 = vmul.f32 %v86, 0.6931472
    %v88 = vlog2.pop %v58
    %v89 = vmul.f32 %v88, 0.6931472
    %v90 = vlog2.pop %v59
    %v91 = vmul.f32 %v90, 0.6931472
    %v92 = vld [vmem:[%s1] sm:$0xff]
    %v93 = vld [vmem:[%s1 + $0x8] sm:$0xff]
    %v94 = vld [vmem:[%s1 + $0x10] sm:$0xff]
    %v95 = vld [vmem:[%s1 + $0x18] sm:$0xff]
    %vm96 = vcmask 261120
    %v98 = vsel %vm96, %v61, 0
    %v101 = vsel %vm96, %v63, 0
    %v104 = vsel %vm96, %v65, 0
    %v107 = vsel %vm96, %v67, 0
    %v110 = vsel %vm96, %v69, 0
    %v113 = vsel %vm96, %v71, 0
    %v116 = vsel %vm96, %v73, 0
    %v119 = vsel %vm96, %v75, 0
    %v122 = vsel %vm96, %v77, 0
    %v125 = vsel %vm96, %v79, 0
    %v128 = vsel %vm96, %v81, 0
    %v131 = vsel %vm96, %v83, 0
    %v134 = vsel %vm96, %v85, 0
    %v137 = vsel %vm96, %v87, 0
    %v140 = vsel %vm96, %v89, 0
    %v143 = vsel %vm96, %v91, 0
    %145 = vmatpush.msra.mxu0 0.0
    %146 = vmatpush.msra.mxu0 0.0
    %147 = vmatpush.msra.mxu0 0.0
    %148 = vmatpush.msra.mxu0 0.0
    %149 = vmatpush.msra.mxu0 0.0
    %150 = vmatpush.msra.mxu0 0.0
    %151 = vmatpush.msra.mxu0 0.0
    %152 = vmatpush.msra.mxu0 0.0
    %153 = vmatpush.msra.mxu0 0.0
    %154 = vmatpush.msra.mxu0 0.0
    %155 = vmatpush.msra.mxu0 0.0
    %156 = vmatpush.msra.mxu0 0.0
    %157 = vmatpush.msra.mxu0 %v95
    %158 = vmatpush.msra.mxu0 %v94
    %159 = vmatpush.msra.mxu0 %v93
    %160 = vmatpush.msra.mxu0 %v92
    %161 = vmatmul.f32.gmra.mxu0 %v98
    %v162 = vpop.f32.mrf.mxu0
    %v163 = vadd.f32 0.0, %v162
    %164 = vmatmul.f32.gmra.mxu0 %v101
    %v165 = vpop.f32.mrf.mxu0
    %v166 = vadd.f32 0.0, %v165
    %167 = vmatmul.f32.gmra.mxu0 %v104
    %v168 = vpop.f32.mrf.mxu0
    %v169 = vadd.f32 0.0, %v168
    %170 = vmatmul.f32.gmra.mxu0 %v107
    %v171 = vpop.f32.mrf.mxu0
    %v172 = vadd.f32 0.0, %v171
    %173 = vmatmul.f32.gmra.mxu0 %v110
    %v174 = vpop.f32.mrf.mxu0
    %v175 = vadd.f32 0.0, %v174
    %176 = vmatmul.f32.gmra.mxu0 %v113
    %v177 = vpop.f32.mrf.mxu0
    %v178 = vadd.f32 0.0, %v177
    %179 = vmatmul.f32.gmra.mxu0 %v116
    %v180 = vpop.f32.mrf.mxu0
    %v181 = vadd.f32 0.0, %v180
    %182 = vmatmul.f32.gmra.mxu0 %v119
    %v183 = vpop.f32.mrf.mxu0
    %v184 = vadd.f32 0.0, %v183
    %185 = vmatmul.f32.gmra.mxu0 %v122
    %v186 = vpop.f32.mrf.mxu0
    %v187 = vadd.f32 0.0, %v186
    %188 = vmatmul.f32.gmra.mxu0 %v125
    %v189 = vpop.f32.mrf.mxu0
    %v190 = vadd.f32 0.0, %v189
    %191 = vmatmul.f32.gmra.mxu0 %v128
    %v192 = vpop.f32.mrf.mxu0
    %v193 = vadd.f32 0.0, %v192
    %194 = vmatmul.f32.gmra.mxu0 %v131
    %v195 = vpop.f32.mrf.mxu0
    %v196 = vadd.f32 0.0, %v195
    %197 = vmatmul.f32.gmra.mxu0 %v134
    %v198 = vpop.f32.mrf.mxu0
    %v199 = vadd.f32 0.0, %v198
    %200 = vmatmul.f32.gmra.mxu0 %v137
    %v201 = vpop.f32.mrf.mxu0
    %v202 = vadd.f32 0.0, %v201
    %203 = vmatmul.f32.gmra.mxu0 %v140
    %v204 = vpop.f32.mrf.mxu0
    %v205 = vadd.f32 0.0, %v204
    %206 = vmatmul.f32.gmra.mxu0 %v143
    %v207 = vpop.f32.mrf.mxu0
    %v208 = vadd.f32 0.0, %v207
    %209 = vdwg.mxu0
    %v210 = vmul.f32 %v163, 1.442695
    %v211 = vpow.pop %v210
    %v212 = vmul.f32 %v166, 1.442695
    %v213 = vpow.pop %v212
    %v214 = vmul.f32 %v169, 1.442695
    %v215 = vpow.pop %v214
    %v216 = vmul.f32 %v172, 1.442695
    %v217 = vpow.pop %v216
    %v218 = vmul.f32 %v175, 1.442695
    %v219 = vpow.pop %v218
    %v220 = vmul.f32 %v178, 1.442695
    %v221 = vpow.pop %v220
    %v222 = vmul.f32 %v181, 1.442695
    %v223 = vpow.pop %v222
    %v224 = vmul.f32 %v184, 1.442695
    %v225 = vpow.pop %v224
    %v226 = vmul.f32 %v187, 1.442695
    %v227 = vpow.pop %v226
    %v228 = vmul.f32 %v190, 1.442695
    %v229 = vpow.pop %v228
    %v230 = vmul.f32 %v193, 1.442695
    %v231 = vpow.pop %v230
    %v232 = vmul.f32 %v196, 1.442695
    %v233 = vpow.pop %v232
    %v234 = vmul.f32 %v199, 1.442695
    %v235 = vpow.pop %v234
    %v236 = vmul.f32 %v202, 1.442695
    %v237 = vpow.pop %v236
    %v238 = vmul.f32 %v205, 1.442695
    %v239 = vpow.pop %v238
    %v240 = vmul.f32 %v208, 1.442695
    %v241 = vpow.pop %v240
    %242 = vst [vmem:[#allocation2] sm:$0xff] %v211
    %243 = vst [vmem:[#allocation2 + $0x8] sm:$0xff] %v213
    %244 = vst [vmem:[#allocation2 + $0x10] sm:$0xff] %v215
    %245 = vst [vmem:[#allocation2 + $0x18] sm:$0xff] %v217
    %246 = vst [vmem:[#allocation2 + $0x20] sm:$0xff] %v219
    %247 = vst [vmem:[#allocation2 + $0x28] sm:$0xff] %v221
    %248 = vst [vmem:[#allocation2 + $0x30] sm:$0xff] %v223
    %249 = vst [vmem:[#allocation2 + $0x38] sm:$0xff] %v225
    %250 = vst [vmem:[#allocation2 + $0x40] sm:$0xff] %v227
    %251 = vst [vmem:[#allocation2 + $0x48] sm:$0xff] %v229
    %252 = vst [vmem:[#allocation2 + $0x50] sm:$0xff] %v231
    %253 = vst [vmem:[#allocation2 + $0x58] sm:$0xff] %v233
    %254 = vst [vmem:[#allocation2 + $0x60] sm:$0xff] %v235
    %255 = vst [vmem:[#allocation2 + $0x68] sm:$0xff] %v237
    %256 = vst [vmem:[#allocation2 + $0x70] sm:$0xff] %v239
    %257 = vst [vmem:[#allocation2 + $0x78] sm:$0xff] %v241
    // Predicated region
    $region10: #{tpu_custom_call.1} parent=1 // pred_check
      _
    $region11: #{tpu_custom_call.1} parent=1 // pred_check_branch
      %259 = sbr.rel (0) target = $region13
    $region12: #{tpu_custom_call.1} parent=1 // pred_region
      %261 = vsyncadd [#allocation3], 0
      %s262 = sshll.u32 [#allocation2], 4
      %s263 = int_to_ptr.vmem [resolvable:$true] %s262
      %s264 = sshll.u32 %s2, 4
      %s265 = int_to_ptr.hbm [resolvable:$true] %s264
      %270 = dma.vmem_to_hbm [thread:$0]  %s263, 2048, %s265, [#allocation3], 128, 128, 8
    $region13: #{tpu_custom_call.1} parent=1 // pred_fallthru
      _
    // Predicated region
    $region14: #{tpu_custom_call.1} parent=1 // pred_check
      _
    $region15: #{tpu_custom_call.1} parent=1 // pred_check_branch
      %272 = sbr.rel (0) target = $region17
    $region16: #{tpu_custom_call.1} parent=1 // pred_region
      %274 = dma.done [#allocation3], 2048
    $region17: #{tpu_custom_call.1} parent=1 // pred_fallthru
      _
    %275 = vsyncpa [#allocation3], 1

</llo_original>
